<compile_context>
chip_gen: v7x
topology: tpu7x:2x2x1
jax: 0.10.0
libtpu: 0.0.40
codegen_flags: <defaults>
</compile_context>

<pallas_src>
import functools

import jax
import jax.numpy as jnp
from jax import lax
from jax.experimental import pallas as pl
from jax.experimental.pallas import tpu as pltpu


# ---------------------------------------------------------------------------
# Wrapper-side weight packing helpers (run once on constants).
# ---------------------------------------------------------------------------
def _blockdiag_1x1(w, wp):
    """(Cin, Cout) 1x1 weight -> block-diagonal (wp*Cin, wp*Cout) GEMM weight acting
    on w-in-lanes activations (rows = (img, h); lanes = (w, c))."""
    ci, co = w.shape
    bd = jnp.zeros((wp, ci, wp, co), jnp.float32)
    for wi in range(wp):
        bd = bd.at[wi, :, wi, :].set(w)
    return bd.reshape(wp * ci, wp * co)


def _toeplitz_kxk(w, wp):
    """(k,k,Cin,Cout) 'same' conv weight -> block-Toeplitz (k*(wp+k-1)*Cin, wp*Cout)
    so the kxk conv becomes ONE GEMM on k row-shifted, w-in-lanes slabs."""
    k, _, ci, co = w.shape
    wpad = wp + k - 1
    t = jnp.zeros((k, wpad, ci, wp, co), jnp.float32)
    for wo in range(wp):
        for kw in range(k):
            t = t.at[:, wo + kw, :, wo, :].set(w[:, kw, :, :])
    return t.reshape(k * wpad * ci, wp * co)


# ---------------------------------------------------------------------------
# Fused forward: MaxPool2d(2) -> VGGConvEncoder (4 branches, summed)
# ---------------------------------------------------------------------------
def downsample_forward(x_nchw, params):
    n, cin, H, W = x_nchw.shape
    assert H % 2 == 0 and W % 2 == 0
    hp, wp = H // 2, W // 2
    hw = hp * wp

    w1, b1 = params["conv1"]      # (1,1,cin,2co), (2co,)   BN already folded
    w2a, b2a = params["conv2a"]   # (1,1,cin,co)
    w2b, b2b = params["conv2b"]   # (3,3,co,2co)
    w3a, b3a = params["conv3a"]   # (1,1,cin,co)
    w3b, b3b = params["conv3b"]   # (5,5,co,2co)
    w4, b4 = params["conv4"]      # (1,1,cin,2co)
    co = w2a.shape[-1]
    co2 = w1.shape[-1]
    neg = float(jnp.finfo(jnp.float32).min)

    # ---- images per grid block: fold batch so M-side work per step is >= 128 rows
    ipb = min(n, max(1, -(-128 // hw)))
    while n % ipb:
        ipb -= 1
    n_blocks = n // ipb
    R = ipb * hp                       # rows in the w-in-lanes layout

    # lane sizes
    L_in = 4 * wp * cin                # packed pool input lanes
    L_p = wp * cin                     # pooled image lanes
    L_t = wp * co                      # 1x1 intermediate lanes
    L_out = wp * co2                   # output lanes (multiple of 128 at toy shapes)
    nf = L_out + 2 * L_t               # fused 1x1 GEMM output width
    W2L = (wp + 2) * co                # pad2 lane width (3x3, pad 1)
    W3L = (wp + 4) * co                # pad3 lane width (5x5, pad 2 after ring fold)
    W4L = (wp + 2) * cin               # pad4 lane width (3x3 maxpool, pad 1)

    # ---- input packing: both pool parities and (w, c) into the lane dim so the
    # 2x2 maxpool is three wide lane-slice maxes in-kernel (one tiny XLA transpose).
    xt = jnp.transpose(x_nchw, (0, 2, 3, 1)).reshape(n, hp, 2, wp, 2, cin)
    x_packed = jnp.transpose(xt, (0, 1, 2, 4, 3, 5)).reshape(n, hp, L_in)

    # ---- fused block-diagonal 1x1 weights: [conv1 | conv2a | conv3a] + conv4
    w_small = jnp.concatenate(
        [_blockdiag_1x1(w1[0, 0], wp),
         _blockdiag_1x1(w2a[0, 0], wp),
         _blockdiag_1x1(w3a[0, 0], wp),
         _blockdiag_1x1(w4[0, 0], wp)], axis=1)                    # (wp*cin, nf+L_out)

    # ---- block-Toeplitz weights: each kxk conv is ONE GEMM
    t2mat = _toeplitz_kxk(w2b, wp)                                 # (3*W2L, L_out)
    t3mat = _toeplitz_kxk(w3b, wp)                                 # (5*W3L, L_out)
    tcat = jnp.concatenate([t2mat, t3mat], axis=0)
    rows2 = t2mat.shape[0]
    rows_total = tcat.shape[0]

    # ---- biases (BN folded), tiled per w so every epilogue is add + relu
    bias_fused = jnp.concatenate([jnp.tile(b1, wp), jnp.tile(b2a, wp), jnp.tile(b3a, wp)])
    bias_24 = jnp.concatenate([jnp.tile(b2b, wp), jnp.tile(b4, wp)])
    ncols = max(bias_fused.shape[0], bias_24.shape[0])
    bias_misc = jnp.zeros((2, ncols), jnp.float32)
    bias_misc = bias_misc.at[0, :bias_fused.shape[0]].set(bias_fused)
    bias_misc = bias_misc.at[1, :bias_24.shape[0]].set(bias_24)

    # ---- VGGConv3: the padded 1x1 conv produces a constant relu(bias) ring around
    # t3; its contribution through the 5x5 conv is a constant (h, w, c) map that we
    # fold into the branch-3 bias, so pad3 only needs a zero border.
    ringv = jnp.maximum(b3a, 0.0)
    ring_img = jnp.zeros((1, hp + 4, wp + 4, co), jnp.float32)
    ring_img = ring_img.at[:, 1:hp + 3, 1:wp + 3, :].set(ringv)
    ring_img = ring_img.at[:, 2:hp + 2, 2:wp + 2, :].set(0.0)
    ring_map = lax.conv_general_dilated(
        ring_img, w3b, (1, 1), "VALID",
        dimension_numbers=("NHWC", "HWIO", "NHWC"),
        precision=lax.Precision.HIGHEST)[0]                         # (hp, wp, co2)
    bias3_map = jnp.tile((ring_map + b3b).reshape(hp, L_out), (ipb, 1))   # (R, L_out)

    def kernel(x_ref, w_ref, t_ref, bmisc_ref, b3_ref, o_ref,
               pad2_ref, pad3_ref, pad4_ref):
        # -------- MaxPool2d(2): three wide (32-lane) maxes ------------------
        xv = x_ref[...]                                             # (ipb, hp, L_in)
        p = jnp.maximum(
            jnp.maximum(xv[:, :, 0:L_p], xv[:, :, L_p:2 * L_p]),
            jnp.maximum(xv[:, :, 2 * L_p:3 * L_p], xv[:, :, 3 * L_p:4 * L_p]))
        p2 = p.reshape(R, L_p)                                      # rows=(img,h), lanes=(w,c)

        # -------- fused 1x1s (conv1 | conv2a | conv3a): ONE GEMM -------------
        z = jnp.dot(p2, w_ref[:, 0:nf], preferred_element_type=jnp.float32)
        zr = jnp.maximum(z + bmisc_ref[0:1, 0:nf], 0.0)
        x1 = zr[:, 0:L_out]                                         # (R, L_out)
        t2 = zr[:, L_out:L_out + L_t]
        t3 = zr[:, L_out + L_t:L_out + 2 * L_t]

        # -------- VGGConv2 tail: 3x3 conv (pad 1) as one Toeplitz GEMM -------
        pad2_ref[:, 0:1, :] = jnp.zeros((ipb, 1, W2L), jnp.float32)
        pad2_ref[:, hp + 1:hp + 2, :] = jnp.zeros((ipb, 1, W2L), jnp.float32)
        pad2_ref[:, :, 0:co] = jnp.zeros((ipb, hp + 2, co), jnp.float32)
        pad2_ref[:, :, co + wp * co:W2L] = jnp.zeros((ipb, hp + 2, co), jnp.float32)
        pad2_ref[:, 1:1 + hp, co:co + wp * co] = t2.reshape(ipb, hp, wp * co)
        x2cols = jnp.concatenate(
            [pad2_ref[:, kh:kh + hp, :].reshape(R, W2L) for kh in range(3)], axis=-1)
        acc2 = jnp.dot(x2cols, t_ref[0:rows2, :], preferred_element_type=jnp.float32)
        x2 = jnp.maximum(acc2 + bmisc_ref[1:2, 0:L_out], 0.0)

        # -------- VGGConv3 tail: 5x5 conv as one Toeplitz GEMM (ring in bias) -
        pad3_ref[:, 0:2, :] = jnp.zeros((ipb, 2, W3L), jnp.float32)
        pad3_ref[:, hp + 2:hp + 4, :] = jnp.zeros((ipb, 2, W3L), jnp.float32)
        pad3_ref[:, :, 0:2 * co] = jnp.zeros((ipb, hp + 4, 2 * co), jnp.float32)
        pad3_ref[:, :, 2 * co + wp * co:W3L] = jnp.zeros((ipb, hp + 4, 2 * co), jnp.float32)
        pad3_ref[:, 2:2 + hp, 2 * co:2 * co + wp * co] = t3.reshape(ipb, hp, wp * co)
        x3cols = jnp.concatenate(
            [pad3_ref[:, kh:kh + hp, :].reshape(R, W3L) for kh in range(5)], axis=-1)
        acc3 = jnp.dot(x3cols, t_ref[rows2:rows_total, :],
                       preferred_element_type=jnp.float32)
        x3 = jnp.maximum(acc3 + b3_ref[...], 0.0)

        # -------- VGGConv4: 3x3/s1/p1 maxpool (wide taps, tree max) + 1x1 ----
        pad4_ref[:, 0:1, :] = jnp.full((ipb, 1, W4L), neg, jnp.float32)
        pad4_ref[:, hp + 1:hp + 2, :] = jnp.full((ipb, 1, W4L), neg, jnp.float32)
        pad4_ref[:, :, 0:cin] = jnp.full((ipb, hp + 2, cin), neg, jnp.float32)
        pad4_ref[:, :, cin + wp * cin:W4L] = jnp.full((ipb, hp + 2, cin), neg, jnp.float32)
        pad4_ref[:, 1:1 + hp, cin:cin + wp * cin] = p
        taps = [pad4_ref[:, kh:kh + hp, kw * cin:(kw + wp) * cin]
                for kh in range(3) for kw in range(3)]
        while len(taps) > 1:
            nxt = [jnp.maximum(taps[i], taps[i + 1]) for i in range(0, len(taps) - 1, 2)]
            if len(taps) % 2:
                nxt.append(taps[-1])
            taps = nxt
        mp2 = taps[0].reshape(R, L_p)
        acc4 = jnp.dot(mp2, w_ref[:, nf:nf + L_out], preferred_element_type=jnp.float32)
        x4 = jnp.maximum(acc4 + bmisc_ref[1:2, L_out:2 * L_out], 0.0)

        # -------- branch sum; lane-dense store: (R, L_out) = (16, 128) -------
        o_ref[...] = (x1 + x2 + x3 + x4).astype(o_ref.dtype)

    out = pl.pallas_call(
        kernel,
        out_shape=jax.ShapeDtypeStruct((n_blocks, R, L_out), jnp.float32),
        grid=(n_blocks,),
        in_specs=[
            pl.BlockSpec((ipb, hp, L_in), lambda i: (i, 0, 0)),
            pl.BlockSpec(w_small.shape, lambda i: (0, 0)),
            pl.BlockSpec(tcat.shape, lambda i: (0, 0)),
            pl.BlockSpec(bias_misc.shape, lambda i: (0, 0)),
            pl.BlockSpec(bias3_map.shape, lambda i: (0, 0)),
        ],
        out_specs=pl.BlockSpec((None, R, L_out), lambda i: (i, 0, 0)),
        scratch_shapes=[
            pltpu.VMEM((ipb, hp + 2, W2L), jnp.float32),   # zero-bordered 3x3 input
            pltpu.VMEM((ipb, hp + 4, W3L), jnp.float32),   # zero-bordered 5x5 input
            pltpu.VMEM((ipb, hp + 2, W4L), jnp.float32),   # NEG-bordered 3x3 maxpool
        ],
        compiler_params=pltpu.CompilerParams(
            dimension_semantics=("parallel",)),
    )(x_packed, w_small, tcat, bias_misc, bias3_map)

    # cheap wrapper-side unpack: (n_blocks, ipb*hp, wp*co2) -> NCHW
    out = out.reshape(n_blocks, ipb, hp, wp, co2)
    return jnp.transpose(out, (0, 1, 4, 2, 3)).reshape(n, co2, hp, wp)


# ---------------------------------------------------------------------------
# Parameters: deterministic synthetic init, inference-mode BatchNorm folded
# into the conv weight (scale) and a single bias per layer.
# ---------------------------------------------------------------------------
def _make_layer(key, k, ci, co, eps=1e-5):
    kw_, kb_, kg_, kbt_, km_, kv_ = jax.random.split(key, 6)
    fan_in = k * k * ci
    w = jax.random.normal(kw_, (k, k, ci, co), jnp.float32) / jnp.sqrt(fan_in)
    conv_b = 0.1 * jax.random.normal(kb_, (co,), jnp.float32)
    gamma = 1.0 + 0.1 * jax.random.normal(kg_, (co,), jnp.float32)
    beta = 0.1 * jax.random.normal(kbt_, (co,), jnp.float32)
    mean = 0.1 * jax.random.normal(km_, (co,), jnp.float32)
    var = 1.0 + 0.1 * jnp.abs(jax.random.normal(kv_, (co,), jnp.float32))
    scale = gamma / jnp.sqrt(var + eps)
    return w * scale, (conv_b - mean) * scale + beta


def init_params(key, cin, cout):
    keys = jax.random.split(key, 6)
    return {
        "conv1":  _make_layer(keys[0], 1, cin, 2 * cout),
        "conv2a": _make_layer(keys[1], 1, cin, cout),
        "conv2b": _make_layer(keys[2], 3, cout, 2 * cout),
        "conv3a": _make_layer(keys[3], 1, cin, cout),
        "conv3b": _make_layer(keys[4], 5, cout, 2 * cout),
        "conv4":  _make_layer(keys[5], 1, cin, 2 * cout),
    }


# ---------------------------------------------------------------------------
# Pure-JAX reference (same folded params) for a structural parity check.
# ---------------------------------------------------------------------------
def reference_forward(x_nchw, params):
    def conv(x, wb, pad):
        w, b = wb
        y = lax.conv_general_dilated(
            x, w, (1, 1), [(pad, pad), (pad, pad)],
            dimension_numbers=("NHWC", "HWIO", "NHWC"),
            precision=lax.Precision.HIGHEST)
        return jnp.maximum(y + b, 0.0)

    x = jnp.transpose(x_nchw, (0, 2, 3, 1))
    p = lax.reduce_window(x, -jnp.inf, lax.max, (1, 2, 2, 1), (1, 2, 2, 1), "VALID")
    x1 = conv(p, params["conv1"], 0)
    x2 = conv(conv(p, params["conv2a"], 0), params["conv2b"], 1)
    x3 = conv(conv(p, params["conv3a"], 1), params["conv3b"], 1)
    mp = lax.reduce_window(p, -jnp.inf, lax.max, (1, 3, 3, 1), (1, 1, 1, 1),
                           [(0, 0), (1, 1), (1, 1), (0, 0)])
    x4 = conv(mp, params["conv4"], 0)
    return jnp.transpose(x1 + x2 + x3 + x4, (0, 3, 1, 2))


if __name__ == "__main__":
    in_channels, out_channels = 4, 8
    n, hsp, wsp = 2, 16, 16

    key = jax.random.PRNGKey(0)
    kx, kp = jax.random.split(key)
    x = jax.random.normal(kx, (n, in_channels, hsp, wsp), jnp.float32)
    params = init_params(kp, in_channels, out_channels)

    fwd = jax.jit(functools.partial(downsample_forward, params=params))
    y = fwd(x)
    jax.block_until_ready(y)
    assert y.shape == (n, 2 * out_channels, hsp // 2, wsp // 2), y.shape
    assert bool(jnp.all(jnp.isfinite(y)))

    y_ref = reference_forward(x, params)
    err = float(jnp.max(jnp.abs(y - y_ref)))
    assert err < 1e-1, f"max abs diff vs reference: {err}"
    print("KERNEL_OK")
</pallas_src>

<mosaic_0001>
module attributes {stable_mosaic.version = 11 : i64} {
  func.func @kernel(%arg0: i32, %arg1: memref<2x8x128xf32, #tpu.memory_space<vmem>>, %arg2: memref<32x384xf32, #tpu.memory_space<vmem>>, %arg3: memref<720x128xf32, #tpu.memory_space<vmem>>, %arg4: memref<2x256xf32, #tpu.memory_space<vmem>>, %arg5: memref<16x128xf32, #tpu.memory_space<vmem>>, %arg6: memref<1x16x128xf32, #tpu.memory_space<vmem>>, %arg7: memref<2x10x80xf32, #tpu.memory_space<vmem>>, %arg8: memref<2x12x96xf32, #tpu.memory_space<vmem>>, %arg9: memref<2x10x40xf32, #tpu.memory_space<vmem>>) attributes {dimension_semantics = [#tpu.dimension_semantics<parallel>], iteration_bounds = array<i64: 1>, scalar_prefetch = 0 : i64, scratch_operands = 3 : i64, tpu.core_type = #tpu.core_type<tc>, window_params = [{transform_indices = @transform_0, window_bounds = array<i64: 2, 8, 128>}, {pipeline_mode = #tpu.pipeline_mode<synchronous>, transform_indices = @transform_1, window_bounds = array<i64: 32, 384>}, {pipeline_mode = #tpu.pipeline_mode<synchronous>, transform_indices = @transform_2, window_bounds = array<i64: 720, 128>}, {pipeline_mode = #tpu.pipeline_mode<synchronous>, transform_indices = @transform_3, window_bounds = array<i64: 2, 256>}, {pipeline_mode = #tpu.pipeline_mode<synchronous>, transform_indices = @transform_4, window_bounds = array<i64: 16, 128>}, {transform_indices = @transform_5, window_bounds = array<i64: 1, 16, 128>}]} {
    %c0 = arith.constant 0 : index
    %c0_0 = arith.constant 0 : index
    %c0_1 = arith.constant 0 : index
    %0 = vector.load %arg1[%c0, %c0_0, %c0_1] : memref<2x8x128xf32, #tpu.memory_space<vmem>>, vector<2x8x128xf32>
    %1 = vector.extract_strided_slice %0 {offsets = [0, 0, 0], sizes = [2, 8, 32], strides = [1, 1, 1]} : vector<2x8x128xf32> to vector<2x8x32xf32>
    %2 = vector.extract_strided_slice %0 {offsets = [0, 0, 32], sizes = [2, 8, 32], strides = [1, 1, 1]} : vector<2x8x128xf32> to vector<2x8x32xf32>
    %3 = arith.maximumf %1, %2 : vector<2x8x32xf32>
    %4 = vector.extract_strided_slice %0 {offsets = [0, 0, 64], sizes = [2, 8, 32], strides = [1, 1, 1]} : vector<2x8x128xf32> to vector<2x8x32xf32>
    %5 = vector.extract_strided_slice %0 {offsets = [0, 0, 96], sizes = [2, 8, 32], strides = [1, 1, 1]} : vector<2x8x128xf32> to vector<2x8x32xf32>
    %6 = arith.maximumf %4, %5 : vector<2x8x32xf32>
    %7 = arith.maximumf %3, %6 : vector<2x8x32xf32>
    %8 = vector.shape_cast %7 : vector<2x8x32xf32> to vector<16x32xf32>
    %c0_2 = arith.constant 0 : index
    %c0_3 = arith.constant 0 : index
    %9 = vector.load %arg2[%c0_2, %c0_3] : memref<32x384xf32, #tpu.memory_space<vmem>>, vector<32x256xf32>
    %cst = arith.constant dense<0.000000e+00> : vector<16x256xf32>
    %10 = tpu.matmul %8, %9, %cst {dimension_numbers = #tpu.dot_dimension_numbers<[1], [0], [0], [1], [0, 0, 1, 1], [], []>} : vector<16x32xf32>, vector<32x256xf32>, vector<16x256xf32> -> vector<16x256xf32>
    %c0_4 = arith.constant 0 : index
    %c0_5 = arith.constant 0 : index
    %11 = vector.load %arg4[%c0_4, %c0_5] : memref<2x256xf32, #tpu.memory_space<vmem>>, vector<1x256xf32>
    %12 = vector.broadcast %11 : vector<1x256xf32> to vector<16x256xf32>
    %13 = arith.addf %10, %12 : vector<16x256xf32>
    %cst_6 = arith.constant 0.000000e+00 : f32
    %14 = vector.broadcast %cst_6 : f32 to vector<16x256xf32>
    %15 = arith.maximumf %13, %14 : vector<16x256xf32>
    %16 = vector.extract_strided_slice %15 {offsets = [0, 0], sizes = [16, 128], strides = [1, 1]} : vector<16x256xf32> to vector<16x128xf32>
    %17 = vector.extract_strided_slice %15 {offsets = [0, 128], sizes = [16, 64], strides = [1, 1]} : vector<16x256xf32> to vector<16x64xf32>
    %18 = vector.extract_strided_slice %15 {offsets = [0, 192], sizes = [16, 64], strides = [1, 1]} : vector<16x256xf32> to vector<16x64xf32>
    %cst_7 = arith.constant 0.000000e+00 : f32
    %19 = vector.broadcast %cst_7 : f32 to vector<2x1x80xf32>
    %c0_8 = arith.constant 0 : index
    %c0_9 = arith.constant 0 : index
    %c0_10 = arith.constant 0 : index
    %20 = vector.load %arg7[%c0_8, %c0_9, %c0_10] : memref<2x10x80xf32, #tpu.memory_space<vmem>>, vector<2x1x80xf32>
    tpu.vector_store %arg7[%c0_8, %c0_9, %c0_10], %19 {strides = array<i32>} : memref<2x10x80xf32, #tpu.memory_space<vmem>>, vector<2x1x80xf32>,
    %cst_11 = arith.constant 0.000000e+00 : f32
    %21 = vector.broadcast %cst_11 : f32 to vector<2x1x80xf32>
    %c0_12 = arith.constant 0 : index
    %c9 = arith.constant 9 : index
    %c0_13 = arith.constant 0 : index
    %22 = vector.load %arg7[%c0_12, %c9, %c0_13] : memref<2x10x80xf32, #tpu.memory_space<vmem>>, vector<2x1x80xf32>
    tpu.vector_store %arg7[%c0_12, %c9, %c0_13], %21 {strides = array<i32>} : memref<2x10x80xf32, #tpu.memory_space<vmem>>, vector<2x1x80xf32>,
    %cst_14 = arith.constant 0.000000e+00 : f32
    %23 = vector.broadcast %cst_14 : f32 to vector<2x10x8xf32>
    %c0_15 = arith.constant 0 : index
    %c0_16 = arith.constant 0 : index
    %c0_17 = arith.constant 0 : index
    %24 = vector.load %arg7[%c0_15, %c0_16, %c0_17] : memref<2x10x80xf32, #tpu.memory_space<vmem>>, vector<2x10x8xf32>
    tpu.vector_store %arg7[%c0_15, %c0_16, %c0_17], %23 {strides = array<i32>} : memref<2x10x80xf32, #tpu.memory_space<vmem>>, vector<2x10x8xf32>,
    %cst_18 = arith.constant 0.000000e+00 : f32
    %25 = vector.broadcast %cst_18 : f32 to vector<2x10x8xf32>
    %c0_19 = arith.constant 0 : index
    %c0_20 = arith.constant 0 : index
    %c72 = arith.constant 72 : index
    %26 = vector.load %arg7[%c0_19, %c0_20, %c72] : memref<2x10x80xf32, #tpu.memory_space<vmem>>, vector<2x10x8xf32>
    tpu.vector_store %arg7[%c0_19, %c0_20, %c72], %25 {strides = array<i32>} : memref<2x10x80xf32, #tpu.memory_space<vmem>>, vector<2x10x8xf32>,
    %27 = vector.shape_cast %17 : vector<16x64xf32> to vector<2x8x64xf32>
    %c0_21 = arith.constant 0 : index
    %c1 = arith.constant 1 : index
    %c8 = arith.constant 8 : index
    %28 = vector.load %arg7[%c0_21, %c1, %c8] : memref<2x10x80xf32, #tpu.memory_space<vmem>>, vector<2x8x64xf32>
    tpu.vector_store %arg7[%c0_21, %c1, %c8], %27 {strides = array<i32>} : memref<2x10x80xf32, #tpu.memory_space<vmem>>, vector<2x8x64xf32>,
    %c0_22 = arith.constant 0 : index
    %c0_23 = arith.constant 0 : index
    %c0_24 = arith.constant 0 : index
    %29 = vector.load %arg7[%c0_22, %c0_23, %c0_24] : memref<2x10x80xf32, #tpu.memory_space<vmem>>, vector<2x8x80xf32>
    %30 = vector.shape_cast %29 : vector<2x8x80xf32> to vector<16x80xf32>
    %c0_25 = arith.constant 0 : index
    %c1_26 = arith.constant 1 : index
    %c0_27 = arith.constant 0 : index
    %31 = vector.load %arg7[%c0_25, %c1_26, %c0_27] : memref<2x10x80xf32, #tpu.memory_space<vmem>>, vector<2x8x80xf32>
    %32 = vector.shape_cast %31 : vector<2x8x80xf32> to vector<16x80xf32>
    %c0_28 = arith.constant 0 : index
    %c2 = arith.constant 2 : index
    %c0_29 = arith.constant 0 : index
    %33 = vector.load %arg7[%c0_28, %c2, %c0_29] : memref<2x10x80xf32, #tpu.memory_space<vmem>>, vector<2x8x80xf32>
    %34 = vector.shape_cast %33 : vector<2x8x80xf32> to vector<16x80xf32>
    %35 = tpu.concatenate %30, %32, %34 in 1 : vector<16x80xf32>, vector<16x80xf32>, vector<16x80xf32> -> vector<16x240xf32>
    %c0_30 = arith.constant 0 : index
    %c0_31 = arith.constant 0 : index
    %36 = vector.load %arg3[%c0_30, %c0_31] : memref<720x128xf32, #tpu.memory_space<vmem>>, vector<240x128xf32>
    %cst_32 = arith.constant dense<0.000000e+00> : vector<16x128xf32>
    %37 = tpu.matmul %35, %36, %cst_32 {dimension_numbers = #tpu.dot_dimension_numbers<[1], [0], [0], [1], [0, 0, 1, 1], [], []>} : vector<16x240xf32>, vector<240x128xf32>, vector<16x128xf32> -> vector<16x128xf32>
    %c1_33 = arith.constant 1 : index
    %c0_34 = arith.constant 0 : index
    %38 = vector.load %arg4[%c1_33, %c0_34] : memref<2x256xf32, #tpu.memory_space<vmem>>, vector<1x128xf32>
    %39 = vector.broadcast %38 : vector<1x128xf32> to vector<16x128xf32>
    %40 = arith.addf %37, %39 : vector<16x128xf32>
    %cst_35 = arith.constant 0.000000e+00 : f32
    %41 = vector.broadcast %cst_35 : f32 to vector<16x128xf32>
    %42 = arith.maximumf %40, %41 : vector<16x128xf32>
    %cst_36 = arith.constant 0.000000e+00 : f32
    %43 = vector.broadcast %cst_36 : f32 to vector<2x2x96xf32>
    %c0_37 = arith.constant 0 : index
    %c0_38 = arith.constant 0 : index
    %c0_39 = arith.constant 0 : index
    %44 = vector.load %arg8[%c0_37, %c0_38, %c0_39] : memref<2x12x96xf32, #tpu.memory_space<vmem>>, vector<2x2x96xf32>
    tpu.vector_store %arg8[%c0_37, %c0_38, %c0_39], %43 {strides = array<i32>} : memref<2x12x96xf32, #tpu.memory_space<vmem>>, vector<2x2x96xf32>,
    %cst_40 = arith.constant 0.000000e+00 : f32
    %45 = vector.broadcast %cst_40 : f32 to vector<2x2x96xf32>
    %c0_41 = arith.constant 0 : index
    %c10 = arith.constant 10 : index
    %c0_42 = arith.constant 0 : index
    %46 = vector.load %arg8[%c0_41, %c10, %c0_42] : memref<2x12x96xf32, #tpu.memory_space<vmem>>, vector<2x2x96xf32>
    tpu.vector_store %arg8[%c0_41, %c10, %c0_42], %45 {strides = array<i32>} : memref<2x12x96xf32, #tpu.memory_space<vmem>>, vector<2x2x96xf32>,
    %cst_43 = arith.constant 0.000000e+00 : f32
    %47 = vector.broadcast %cst_43 : f32 to vector<2x12x16xf32>
    %c0_44 = arith.constant 0 : index
    %c0_45 = arith.constant 0 : index
    %c0_46 = arith.constant 0 : index
    %48 = vector.load %arg8[%c0_44, %c0_45, %c0_46] : memref<2x12x96xf32, #tpu.memory_space<vmem>>, vector<2x12x16xf32>
    tpu.vector_store %arg8[%c0_44, %c0_45, %c0_46], %47 {strides = array<i32>} : memref<2x12x96xf32, #tpu.memory_space<vmem>>, vector<2x12x16xf32>,
    %cst_47 = arith.constant 0.000000e+00 : f32
    %49 = vector.broadcast %cst_47 : f32 to vector<2x12x16xf32>
    %c0_48 = arith.constant 0 : index
    %c0_49 = arith.constant 0 : index
    %c80 = arith.constant 80 : index
    %50 = vector.load %arg8[%c0_48, %c0_49, %c80] : memref<2x12x96xf32, #tpu.memory_space<vmem>>, vector<2x12x16xf32>
    tpu.vector_store %arg8[%c0_48, %c0_49, %c80], %49 {strides = array<i32>} : memref<2x12x96xf32, #tpu.memory_space<vmem>>, vector<2x12x16xf32>,
    %51 = vector.shape_cast %18 : vector<16x64xf32> to vector<2x8x64xf32>
    %c0_50 = arith.constant 0 : index
    %c2_51 = arith.constant 2 : index
    %c16 = arith.constant 16 : index
    %52 = vector.load %arg8[%c0_50, %c2_51, %c16] : memref<2x12x96xf32, #tpu.memory_space<vmem>>, vector<2x8x64xf32>
    tpu.vector_store %arg8[%c0_50, %c2_51, %c16], %51 {strides = array<i32>} : memref<2x12x96xf32, #tpu.memory_space<vmem>>, vector<2x8x64xf32>,
    %c0_52 = arith.constant 0 : index
    %c0_53 = arith.constant 0 : index
    %c0_54 = arith.constant 0 : index
    %53 = vector.load %arg8[%c0_52, %c0_53, %c0_54] : memref<2x12x96xf32, #tpu.memory_space<vmem>>, vector<2x8x96xf32>
    %54 = vector.shape_cast %53 : vector<2x8x96xf32> to vector<16x96xf32>
    %c0_55 = arith.constant 0 : index
    %c1_56 = arith.constant 1 : index
    %c0_57 = arith.constant 0 : index
    %55 = vector.load %arg8[%c0_55, %c1_56, %c0_57] : memref<2x12x96xf32, #tpu.memory_space<vmem>>, vector<2x8x96xf32>
    %56 = vector.shape_cast %55 : vector<2x8x96xf32> to vector<16x96xf32>
    %c0_58 = arith.constant 0 : index
    %c2_59 = arith.constant 2 : index
    %c0_60 = arith.constant 0 : index
    %57 = vector.load %arg8[%c0_58, %c2_59, %c0_60] : memref<2x12x96xf32, #tpu.memory_space<vmem>>, vector<2x8x96xf32>
    %58 = vector.shape_cast %57 : vector<2x8x96xf32> to vector<16x96xf32>
    %c0_61 = arith.constant 0 : index
    %c3 = arith.constant 3 : index
    %c0_62 = arith.constant 0 : index
    %59 = vector.load %arg8[%c0_61, %c3, %c0_62] : memref<2x12x96xf32, #tpu.memory_space<vmem>>, vector<2x8x96xf32>
    %60 = vector.shape_cast %59 : vector<2x8x96xf32> to vector<16x96xf32>
    %c0_63 = arith.constant 0 : index
    %c4 = arith.constant 4 : index
    %c0_64 = arith.constant 0 : index
    %61 = vector.load %arg8[%c0_63, %c4, %c0_64] : memref<2x12x96xf32, #tpu.memory_space<vmem>>, vector<2x8x96xf32>
    %62 = vector.shape_cast %61 : vector<2x8x96xf32> to vector<16x96xf32>
    %63 = tpu.concatenate %54, %56, %58, %60, %62 in 1 : vector<16x96xf32>, vector<16x96xf32>, vector<16x96xf32>, vector<16x96xf32>, vector<16x96xf32> -> vector<16x480xf32>
    %c240 = arith.constant 240 : index
    %c0_65 = arith.constant 0 : index
    %64 = vector.load %arg3[%c240, %c0_65] : memref<720x128xf32, #tpu.memory_space<vmem>>, vector<480x128xf32>
    %cst_66 = arith.constant dense<0.000000e+00> : vector<16x128xf32>
    %65 = tpu.matmul %63, %64, %cst_66 {dimension_numbers = #tpu.dot_dimension_numbers<[1], [0], [0], [1], [0, 0, 1, 1], [], []>} : vector<16x480xf32>, vector<480x128xf32>, vector<16x128xf32> -> vector<16x128xf32>
    %c0_67 = arith.constant 0 : index
    %c0_68 = arith.constant 0 : index
    %66 = vector.load %arg5[%c0_67, %c0_68] : memref<16x128xf32, #tpu.memory_space<vmem>>, vector<16x128xf32>
    %67 = arith.addf %65, %66 : vector<16x128xf32>
    %cst_69 = arith.constant 0.000000e+00 : f32
    %68 = vector.broadcast %cst_69 : f32 to vector<16x128xf32>
    %69 = arith.maximumf %67, %68 : vector<16x128xf32>
    %cst_70 = arith.constant -3.40282347E+38 : f32
    %70 = vector.broadcast %cst_70 : f32 to vector<2x1x40xf32>
    %c0_71 = arith.constant 0 : index
    %c0_72 = arith.constant 0 : index
    %c0_73 = arith.constant 0 : index
    %71 = vector.load %arg9[%c0_71, %c0_72, %c0_73] : memref<2x10x40xf32, #tpu.memory_space<vmem>>, vector<2x1x40xf32>
    tpu.vector_store %arg9[%c0_71, %c0_72, %c0_73], %70 {strides = array<i32>} : memref<2x10x40xf32, #tpu.memory_space<vmem>>, vector<2x1x40xf32>,
    %cst_74 = arith.constant -3.40282347E+38 : f32
    %72 = vector.broadcast %cst_74 : f32 to vector<2x1x40xf32>
    %c0_75 = arith.constant 0 : index
    %c9_76 = arith.constant 9 : index
    %c0_77 = arith.constant 0 : index
    %73 = vector.load %arg9[%c0_75, %c9_76, %c0_77] : memref<2x10x40xf32, #tpu.memory_space<vmem>>, vector<2x1x40xf32>
    tpu.vector_store %arg9[%c0_75, %c9_76, %c0_77], %72 {strides = array<i32>} : memref<2x10x40xf32, #tpu.memory_space<vmem>>, vector<2x1x40xf32>,
    %cst_78 = arith.constant -3.40282347E+38 : f32
    %74 = vector.broadcast %cst_78 : f32 to vector<2x10x4xf32>
    %c0_79 = arith.constant 0 : index
    %c0_80 = arith.constant 0 : index
    %c0_81 = arith.constant 0 : index
    %75 = vector.load %arg9[%c0_79, %c0_80, %c0_81] : memref<2x10x40xf32, #tpu.memory_space<vmem>>, vector<2x10x4xf32>
    tpu.vector_store %arg9[%c0_79, %c0_80, %c0_81], %74 {strides = array<i32>} : memref<2x10x40xf32, #tpu.memory_space<vmem>>, vector<2x10x4xf32>,
    %cst_82 = arith.constant -3.40282347E+38 : f32
    %76 = vector.broadcast %cst_82 : f32 to vector<2x10x4xf32>
    %c0_83 = arith.constant 0 : index
    %c0_84 = arith.constant 0 : index
    %c36 = arith.constant 36 : index
    %77 = vector.load %arg9[%c0_83, %c0_84, %c36] : memref<2x10x40xf32, #tpu.memory_space<vmem>>, vector<2x10x4xf32>
    tpu.vector_store %arg9[%c0_83, %c0_84, %c36], %76 {strides = array<i32>} : memref<2x10x40xf32, #tpu.memory_space<vmem>>, vector<2x10x4xf32>,
    %c0_85 = arith.constant 0 : index
    %c1_86 = arith.constant 1 : index
    %c4_87 = arith.constant 4 : index
    %78 = vector.load %arg9[%c0_85, %c1_86, %c4_87] : memref<2x10x40xf32, #tpu.memory_space<vmem>>, vector<2x8x32xf32>
    tpu.vector_store %arg9[%c0_85, %c1_86, %c4_87], %7 {strides = array<i32>} : memref<2x10x40xf32, #tpu.memory_space<vmem>>, vector<2x8x32xf32>,
    %c0_88 = arith.constant 0 : index
    %c0_89 = arith.constant 0 : index
    %c0_90 = arith.constant 0 : index
    %79 = vector.load %arg9[%c0_88, %c0_89, %c0_90] : memref<2x10x40xf32, #tpu.memory_space<vmem>>, vector<2x8x32xf32>
    %c0_91 = arith.constant 0 : index
    %c0_92 = arith.constant 0 : index
    %c4_93 = arith.constant 4 : index
    %80 = vector.load %arg9[%c0_91, %c0_92, %c4_93] : memref<2x10x40xf32, #tpu.memory_space<vmem>>, vector<2x8x32xf32>
    %c0_94 = arith.constant 0 : index
    %c0_95 = arith.constant 0 : index
    %c8_96 = arith.constant 8 : index
    %81 = vector.load %arg9[%c0_94, %c0_95, %c8_96] : memref<2x10x40xf32, #tpu.memory_space<vmem>>, vector<2x8x32xf32>
    %c0_97 = arith.constant 0 : index
    %c1_98 = arith.constant 1 : index
    %c0_99 = arith.constant 0 : index
    %82 = vector.load %arg9[%c0_97, %c1_98, %c0_99] : memref<2x10x40xf32, #tpu.memory_space<vmem>>, vector<2x8x32xf32>
    %c0_100 = arith.constant 0 : index
    %c1_101 = arith.constant 1 : index
    %c4_102 = arith.constant 4 : index
    %83 = vector.load %arg9[%c0_100, %c1_101, %c4_102] : memref<2x10x40xf32, #tpu.memory_space<vmem>>, vector<2x8x32xf32>
    %c0_103 = arith.constant 0 : index
    %c1_104 = arith.constant 1 : index
    %c8_105 = arith.constant 8 : index
    %84 = vector.load %arg9[%c0_103, %c1_104, %c8_105] : memref<2x10x40xf32, #tpu.memory_space<vmem>>, vector<2x8x32xf32>
    %c0_106 = arith.constant 0 : index
    %c2_107 = arith.constant 2 : index
    %c0_108 = arith.constant 0 : index
    %85 = vector.load %arg9[%c0_106, %c2_107, %c0_108] : memref<2x10x40xf32, #tpu.memory_space<vmem>>, vector<2x8x32xf32>
    %c0_109 = arith.constant 0 : index
    %c2_110 = arith.constant 2 : index
    %c4_111 = arith.constant 4 : index
    %86 = vector.load %arg9[%c0_109, %c2_110, %c4_111] : memref<2x10x40xf32, #tpu.memory_space<vmem>>, vector<2x8x32xf32>
    %c0_112 = arith.constant 0 : index
    %c2_113 = arith.constant 2 : index
    %c8_114 = arith.constant 8 : index
    %87 = vector.load %arg9[%c0_112, %c2_113, %c8_114] : memref<2x10x40xf32, #tpu.memory_space<vmem>>, vector<2x8x32xf32>
    %88 = arith.maximumf %79, %80 : vector<2x8x32xf32>
    %89 = arith.maximumf %81, %82 : vector<2x8x32xf32>
    %90 = arith.maximumf %83, %84 : vector<2x8x32xf32>
    %91 = arith.maximumf %85, %86 : vector<2x8x32xf32>
    %92 = arith.maximumf %88, %89 : vector<2x8x32xf32>
    %93 = arith.maximumf %90, %91 : vector<2x8x32xf32>
    %94 = arith.maximumf %92, %93 : vector<2x8x32xf32>
    %95 = arith.maximumf %94, %87 : vector<2x8x32xf32>
    %96 = vector.shape_cast %95 : vector<2x8x32xf32> to vector<16x32xf32>
    %c0_115 = arith.constant 0 : index
    %c256 = arith.constant 256 : index
    %97 = vector.load %arg2[%c0_115, %c256] : memref<32x384xf32, #tpu.memory_space<vmem>>, vector<32x128xf32>
    %cst_116 = arith.constant dense<0.000000e+00> : vector<16x128xf32>
    %98 = tpu.matmul %96, %97, %cst_116 {dimension_numbers = #tpu.dot_dimension_numbers<[1], [0], [0], [1], [0, 0, 1, 1], [], []>} : vector<16x32xf32>, vector<32x128xf32>, vector<16x128xf32> -> vector<16x128xf32>
    %c1_117 = arith.constant 1 : index
    %c128 = arith.constant 128 : index
    %99 = vector.load %arg4[%c1_117, %c128] : memref<2x256xf32, #tpu.memory_space<vmem>>, vector<1x128xf32>
    %100 = vector.broadcast %99 : vector<1x128xf32> to vector<16x128xf32>
    %101 = arith.addf %98, %100 : vector<16x128xf32>
    %cst_118 = arith.constant 0.000000e+00 : f32
    %102 = vector.broadcast %cst_118 : f32 to vector<16x128xf32>
    %103 = arith.maximumf %101, %102 : vector<16x128xf32>
    %104 = arith.addf %16, %42 : vector<16x128xf32>
    %105 = arith.addf %104, %69 : vector<16x128xf32>
    %106 = arith.addf %105, %103 : vector<16x128xf32>
    %c0_119 = arith.constant 0 : index
    %c0_120 = arith.constant 0 : index
    %c0_121 = arith.constant 0 : index
    %107 = vector.load %arg6[%c0_119, %c0_120, %c0_121] : memref<1x16x128xf32, #tpu.memory_space<vmem>>, vector<1x16x128xf32>
    %108 = vector.shape_cast %107 : vector<1x16x128xf32> to vector<16x128xf32>
    %109 = vector.shape_cast %106 : vector<16x128xf32> to vector<1x16x128xf32>
    tpu.vector_store %arg6[%c0_119, %c0_120, %c0_121], %109 {strides = array<i32>} : memref<1x16x128xf32, #tpu.memory_space<vmem>>, vector<1x16x128xf32>,
    return
  }
  func.func @transform_0(%arg0: i32) -> (i32, i32, i32) {
    %c0_i32 = arith.constant 0 : i32
    %c0_i32_0 = arith.constant 0 : i32
    %c0_i32_1 = arith.constant 0 : i32
    return %arg0, %c0_i32, %c0_i32_0 : i32, i32, i32
  }
  func.func @transform_1(%arg0: i32) -> (i32, i32) {
    %c0_i32 = arith.constant 0 : i32
    %c0_i32_0 = arith.constant 0 : i32
    %c0_i32_1 = arith.constant 0 : i32
    return %c0_i32, %c0_i32_0 : i32, i32
  }
  func.func @transform_2(%arg0: i32) -> (i32, i32) {
    %c0_i32 = arith.constant 0 : i32
    %c0_i32_0 = arith.constant 0 : i32
    %c0_i32_1 = arith.constant 0 : i32
    return %c0_i32, %c0_i32_0 : i32, i32
  }
  func.func @transform_3(%arg0: i32) -> (i32, i32) {
    %c0_i32 = arith.constant 0 : i32
    %c0_i32_0 = arith.constant 0 : i32
    %c0_i32_1 = arith.constant 0 : i32
    return %c0_i32, %c0_i32_0 : i32, i32
  }
  func.func @transform_4(%arg0: i32) -> (i32, i32) {
    %c0_i32 = arith.constant 0 : i32
    %c0_i32_0 = arith.constant 0 : i32
    %c0_i32_1 = arith.constant 0 : i32
    return %c0_i32, %c0_i32_0 : i32, i32
  }
  func.func @transform_5(%arg0: i32) -> (i32, i32, i32) {
    %c0_i32 = arith.constant 0 : i32
    %c0_i32_0 = arith.constant 0 : i32
    %c0_i32_1 = arith.constant 0 : i32
    return %arg0, %c0_i32, %c0_i32_0 : i32, i32, i32
  }
}

</mosaic_0001>

<llo_original>
// kernel: tile.30
$region0: #{tile.30}
  #allocation0 [shape = 's32[1]{0}', space=sflag, size = 0x4, scoped, tag = 'scoped memory for tile.30']
  %s0 = inlined_call_operand.vmem [shape: f32[8], index: 0, kind: input, shape index: {}]
  %s1 = inlined_call_operand.vmem [shape: f32[8,8], index: 1, kind: output, shape index: {}]
  // Predicated region
  $region2: #{tile.30} parent=0 // pred_check
    _
  $region3: #{tile.30} parent=0 // pred_check_branch
    %3 = sbr.rel (0) target = $region5
  $region4: #{tile.30} parent=0 // pred_region
    _
  $region5: #{tile.30} parent=0 // pred_fallthru
    _
  %v4 = vld [vmem:[%s0] ss:$0 sm:$0xff]
  %5 = vst [vmem:[%s1] sm:$0xff] %v4

// kernel: tile.31
$region0: #{tile.31}
  %s0 = inlined_call_operand.vmem [shape: f32[8,8], index: 0, kind: input, shape index: {}]
  %s1 = inlined_call_operand.vmem [shape: f32[64], index: 1, kind: output, shape index: {}]
  $region1: #{tile.31} parent=0
    #allocation0 [shape = 'u8[4096]{0}', space=vmem, size = 0x1000, scoped, tag = 'scoped mem for output reshape']
    %v2 = vld [vmem:[%s0] sm:$0x1]
    %vm3 = vcmask 64512
    %4 = vst.msk [vmem:[#allocation0] sm:$0x1] %vm3, %v2
    %s5 = scalar_lea.vmem %s0, 7
    %v6 = vld [vmem:[%s5] sm:$0x1]
    %7 = vrot.lane.b32.xlu0 %v6, 56
    %v8 = vpop.permute.xlu0 %7
    %vm9 = vcmask 523712
    %10 = vst.msk [vmem:[#allocation0] sm:$0x1] %vm9, %v8
    %s11 = scalar_lea.vmem %s0, 6
    %v12 = vld [vmem:[%s11] sm:$0x1]
    %13 = vrot.lane.b32.xlu0 %v12, 48
    %v14 = vpop.permute.xlu0 %13
    %vm15 = vcmask 458112
    %16 = vst.msk [vmem:[#allocation0] sm:$0x1] %vm15, %v14
    %s17 = scalar_lea.vmem %s0, 5
    %v18 = vld [vmem:[%s17] sm:$0x1]
    %19 = vrot.lane.b32.xlu0 %v18, 40
    %v20 = vpop.permute.xlu0 %19
    %vm21 = vcmask 392512
    %22 = vst.msk [vmem:[#allocation0] sm:$0x1] %vm21, %v20
    %s23 = scalar_lea.vmem %s0, 4
    %v24 = vld [vmem:[%s23] sm:$0x1]
    %25 = vrot.lane.b32.xlu0 %v24, 32
    %v26 = vpop.permute.xlu0 %25
    %vm27 = vcmask 326912
    %28 = vst.msk [vmem:[#allocation0] sm:$0x1] %vm27, %v26
    %s29 = scalar_lea.vmem %s0, 3
    %v30 = vld [vmem:[%s29] sm:$0x1]
    %31 = vrot.lane.b32.xlu0 %v30, 24
    %v32 = vpop.permute.xlu0 %31
    %vm33 = vcmask 261312
    %34 = vst.msk [vmem:[#allocation0] sm:$0x1] %vm33, %v32
    %s35 = scalar_lea.vmem %s0, 2
    %v36 = vld [vmem:[%s35] sm:$0x1]
    %37 = vrot.lane.b32.xlu0 %v36, 16
    %v38 = vpop.permute.xlu0 %37
    %vm39 = vcmask 195712
    %40 = vst.msk [vmem:[#allocation0] sm:$0x1] %vm39, %v38
    %s41 = scalar_lea.vmem %s0, 1
    %v42 = vld [vmem:[%s41] sm:$0x1]
    %43 = vrot.lane.b32.xlu0 %v42, 8
    %v44 = vpop.permute.xlu0 %43
    %vm45 = vcmask 130112
    %46 = vst.msk [vmem:[#allocation0] sm:$0x1] %vm45, %v44
    %s48 = sshllo.u32 0, 1
    %v50 = vld [vmem:[#allocation0] sm:%s48]
    %s51 = sshllo.u32 0, 1
    %52 = vst [vmem:[%s1] sm:%s51] %v50

// kernel: downsample_forward.1
$region0: #{downsample_forward.1}
  #allocation0 [shape = 'u32[]', space=smem, size = 0x4, offset = 0x4, fixed_abs, tag = 'smem constant byte address 0x4 - core index']
  #allocation1 [shape = 'u32[144,128]{1,0:T(1,128)}', space=vmem, size = 0x12000, scoped, tag = 'internal scratch']
  #allocation2 [shape = 'f32[2,10,80]{2,1,0:T(8,128)}', space=vmem, size = 0x4000, scoped, tag = 'scratch operand']
  #allocation3 [shape = 'f32[2,12,96]{2,1,0:T(8,128)}', space=vmem, size = 0x4000, scoped, tag = 'scratch operand']
  #allocation4 [shape = 'f32[2,10,40]{2,1,0:T(8,128)}', space=vmem, size = 0x4000, scoped, tag = 'scratch operand']
  %s0 = inlined_call_operand.vmem [shape: f32[2,8,128], index: 0, kind: input, shape index: {}]
  %s1 = inlined_call_operand.vmem [shape: f32[32,384], index: 1, kind: input, shape index: {}]
  %s2 = inlined_call_operand.vmem [shape: f32[720,128], index: 2, kind: input, shape index: {}]
  %s3 = inlined_call_operand.vmem [shape: f32[2,256], index: 3, kind: input, shape index: {}]
  %s4 = inlined_call_operand.vmem [shape: f32[16,128], index: 4, kind: input, shape index: {}]
  %s5 = inlined_call_operand.vmem [shape: f32[1,16,128], index: 5, kind: output, shape index: {}]
  %s6 = sld [smem:[#allocation0]]
  $region30: #{downsample_forward.1} parent=0
    _
  %s8 = ssub.s32 1, %s6
  %s9 = scalar_select 0, %s8, %s6
  // Predicated region
  $region2: #{downsample_forward.1} parent=0 // pred_check
    _
  $region3: #{downsample_forward.1} parent=0 // pred_check_branch
    %11 = sbr.rel (0) target = $region5
  $region4: #{downsample_forward.1} parent=0 // pred_region
    _
  $region5: #{downsample_forward.1} parent=0 // pred_fallthru
    _
  // Predicated region
  $region6: #{downsample_forward.1} parent=0 // pred_check
    _
  $region7: #{downsample_forward.1} parent=0 // pred_check_branch
    %13 = sbr.rel (0) target = $region9
  $region8: #{downsample_forward.1} parent=0 // pred_region
    _
  $region9: #{downsample_forward.1} parent=0 // pred_fallthru
    _
  // Predicated region
  $region10: #{downsample_forward.1} parent=0 // pred_check
    _
  $region11: #{downsample_forward.1} parent=0 // pred_check_branch
    %15 = sbr.rel (0) target = $region13
  $region12: #{downsample_forward.1} parent=0 // pred_region
    _
  $region13: #{downsample_forward.1} parent=0 // pred_fallthru
    _
  // Predicated region
  $region14: #{downsample_forward.1} parent=0 // pred_check
    _
  $region15: #{downsample_forward.1} parent=0 // pred_check_branch
    %17 = sbr.rel (0) target = $region17
  $region16: #{downsample_forward.1} parent=0 // pred_region
    _
  $region17: #{downsample_forward.1} parent=0 // pred_fallthru
    _
  // Predicated region
  $region18: #{downsample_forward.1} parent=0 // pred_check
    _
  $region19: #{downsample_forward.1} parent=0 // pred_check_branch
    %19 = sbr.rel (0) target = $region21
  $region20: #{downsample_forward.1} parent=0 // pred_region
    _
  $region21: #{downsample_forward.1} parent=0 // pred_fallthru
    _
  %v20 = vld [vmem:[%s0] sm:$0xff]
  %v21 = vld [vmem:[%s0 + $0x8] sm:$0xff]
  %24 = vrot.lane.b32.xlu0 %v20, 96
  %v25 = vpop.permute.xlu0 %24
  %26 = vrot.lane.b32.xlu0 %v21, 96
  %v27 = vpop.permute.xlu0 %26
  %v30 = vmax.f32 %v20, %v25
  %v31 = vmax.f32 %v21, %v27
  %34 = vrot.lane.b32.xlu0 %v30, 64
  %v35 = vpop.permute.xlu0 %34
  %36 = vrot.lane.b32.xlu0 %v31, 64
  %v37 = vpop.permute.xlu0 %36
  %v40 = vmax.f32 %v30, %v35
  %v41 = vmax.f32 %v31, %v37
  %v42 = vld [vmem:[%s1] sm:$0xff]
  %v43 = vld [vmem:[%s1 + $0x8] sm:$0xff]
  %v44 = vld [vmem:[%s1 + $0x18] sm:$0xff]
  %v45 = vld [vmem:[%s1 + $0x20] sm:$0xff]
  %v46 = vld [vmem:[%s1 + $0x30] sm:$0xff]
  %v47 = vld [vmem:[%s1 + $0x38] sm:$0xff]
  %v48 = vld [vmem:[%s1 + $0x48] sm:$0xff]
  %v49 = vld [vmem:[%s1 + $0x50] sm:$0xff]
  %v50 = vld [vmem:[%s3] ss:$2 sm:$0x3]
  %v52 = vlaneseq
  %v53 = vshrl.u32 %v52, 7
  %v54 = vsub.s32 0, %v53
  %v55 = vrot.slane %v50, %v54
  %v56 = vlaneseq
  %v57 = vshrl.u32 %v56, 7
  %v58 = vsub.s32 1, %v57
  %v59 = vrot.slane %v50, %v58
  %vm62 = vcmask 261120
  %v64 = vsel %vm62, %v40, 0
  %v67 = vsel %vm62, %v41, 0
  %69 = vmatprep.subr.mxu0 %v43
  %70 = vmatpush1.msra.mxu0 %v42
  %71 = vmatprep.subr.mxu0 %v45
  %72 = vmatpush1.msra.mxu0 %v44
  %73 = vmatprep.subr.mxu0 %v47
  %74 = vmatpush1.msra.mxu0 %v46
  %75 = vmatprep.subr.mxu0 %v49
  %76 = vmatpush1.msra.mxu0 %v48
  %77 = vmatprep.subr.mxu0 0.0
  %78 = vmatpush1.msra.mxu0 0.0
  %79 = vmatprep.subr.mxu0 0.0
  %80 = vmatpush1.msra.mxu0 0.0
  %81 = vmatprep.subr.mxu0 0.0
  %82 = vmatpush1.msra.mxu0 0.0
  %83 = vmatprep.subr.mxu0 0.0
  %84 = vmatpush1.msra.mxu0 0.0
  %85 = vmatprep.subr.mxu0 0.0
  %86 = vmatpush1.msra.mxu0 0.0
  %87 = vmatprep.subr.mxu0 0.0
  %88 = vmatpush1.msra.mxu0 0.0
  %89 = vmatprep.subr.mxu0 0.0
  %90 = vmatpush1.msra.mxu0 0.0
  %91 = vmatprep.subr.mxu0 0.0
  %92 = vmatpush1.msra.mxu0 0.0
  %93 = vmatprep.subr.mxu0 0.0
  %94 = vmatpush1.msra.mxu0 0.0
  %95 = vmatprep.subr.mxu0 0.0
  %96 = vmatpush1.msra.mxu0 0.0
  %97 = vmatprep.subr.mxu0 0.0
  %98 = vmatpush1.msra.mxu0 0.0
  %99 = vmatprep.subr.mxu0 0.0
  %100 = vmatpush1.msra.mxu0 0.0
  %101 = vmatprep.subr.mxu0 0.0
  %102 = vmatpush1.msra.mxu0 0.0
  %103 = vmatprep.subr.mxu0 0.0
  %104 = vmatpush1.msra.mxu0 0.0
  %105 = vmatprep.subr.mxu0 0.0
  %106 = vmatpush1.msra.mxu0 0.0
  %107 = vmatprep.subr.mxu0 0.0
  %108 = vmatpush1.msra.mxu0 0.0
  %109 = vmatprep.subr.mxu0 0.0
  %110 = vmatpush1.msra.mxu0 0.0
  %111 = vmatprep.subr.mxu0 0.0
  %112 = vmatpush1.msra.mxu0 0.0
  %113 = vmatprep.subr.mxu0 0.0
  %114 = vmatpush1.msra.mxu0 0.0
  %115 = vmatprep.subr.mxu0 0.0
  %116 = vmatpush1.msra.mxu0 0.0
  %117 = vmatprep.subr.mxu0 0.0
  %118 = vmatpush1.msra.mxu0 0.0
  %119 = vmatprep.subr.mxu0 0.0
  %120 = vmatpush1.msra.mxu0 0.0
  %121 = vmatprep.subr.mxu0 0.0
  %122 = vmatpush1.msra.mxu0 0.0
  %123 = vmatprep.subr.mxu0 0.0
  %124 = vmatpush1.msra.mxu0 0.0
  %125 = vmatprep.subr.mxu0 0.0
  %126 = vmatpush1.msra.mxu0 0.0
  %127 = vmatprep.subr.mxu0 0.0
  %128 = vmatpush1.msra.mxu0 0.0
  %129 = vmatprep.subr.mxu0 0.0
  %130 = vmatpush1.msra.mxu0 0.0
  %131 = vmatprep.subr.mxu0 0.0
  %132 = vmatpush1.msra.mxu0 0.0
  %133 = vmatprep.mubr.f32.mxu0 0.0
  %134 = vmatmul.mubr.f32.gmra.mrb[0].mxu0 %v64
  %v135 = vpop.f32.mrb[0].mxu0
  %v136 = vadd.f32 %v55, %v135
  %v137 = vpop.f32.mrb[0].mxu0
  %v138 = vadd.f32 %v59, %v137
  %139 = vmatprep.mubr.f32.mxu0 0.0
  %140 = vmatmul.mubr.f32.gmra.mrb[0].mxu0 %v67
  %v141 = vpop.f32.mrb[0].mxu0
  %v142 = vadd.f32 %v55, %v141
  %v143 = vpop.f32.mrb[0].mxu0
  %v144 = vadd.f32 %v59, %v143
  %145 = vdwg.mxu0
  %v146 = vmax.f32 %v136, 0.0
  %v147 = vmax.f32 %v138, 0.0
  %v148 = vmax.f32 %v142, 0.0
  %v149 = vmax.f32 %v144, 0.0
  %vm150 = vcmask 647168
  %151 = vst.msk [vmem:[#allocation2] sm:$0x1] %vm150, 0.0
  %152 = vst.msk [vmem:[#allocation2 + $0x10] sm:$0x1] %vm150, 0.0
  %153 = vst.msk [vmem:[#allocation2 + $0x9] sm:$0x1] %vm150, 0.0
  %154 = vst.msk [vmem:[#allocation2 + $0x19] sm:$0x1] %vm150, 0.0
  %vm155 = vcmask 64512
  %156 = vst.msk [vmem:[#allocation2] sm:$0xff] %vm155, 0.0
  %vm157 = vcmask 58368
  %158 = vst.msk [vmem:[#allocation2 + $0x8] sm:$0x3] %vm157, 0.0
  %159 = vst.msk [vmem:[#allocation2 + $0x10] sm:$0xff] %vm155, 0.0
  %160 = vst.msk [vmem:[#allocation2 + $0x18] sm:$0x3] %vm157, 0.0
  %vm161 = vcmask 654912
  %162 = vst.msk [vmem:[#allocation2] sm:$0xff] %vm161, 0.0
  %vm163 = vcmask 648768
  %164 = vst.msk [vmem:[#allocation2 + $0x8] sm:$0x3] %vm163, 0.0
  %165 = vst.msk [vmem:[#allocation2 + $0x10] sm:$0xff] %vm161, 0.0
  %166 = vst.msk [vmem:[#allocation2 + $0x18] sm:$0x3] %vm163, 0.0
  %169 = vrot.lane.b32.xlu0 %v147, 8
  %v170 = vpop.permute.xlu0 %169
  %171 = vrot.lane.b32.xlu0 %v149, 8
  %v172 = vpop.permute.xlu0 %171
  %vm175 = vcmask 588864
  %176 = vst.msk [vmem:[#allocation2 + $0x1] sm:$0xff] %vm175, %v170
  %177 = vst.msk [vmem:[#allocation2 + $0x11] sm:$0xff] %vm175, %v172
  %v178 = vld [vmem:[#allocation2] sm:$0xff]
  %v179 = vld [vmem:[#allocation2 + $0x10] sm:$0xff]
  %v180 = vld [vmem:[#allocation2 + $0x1] sm:$0xff]
  %v181 = vld [vmem:[#allocation2 + $0x11] sm:$0xff]
  %v182 = vld [vmem:[#allocation2 + $0x2] sm:$0xff]
  %v183 = vld [vmem:[#allocation2 + $0x12] sm:$0xff]
  %186 = vrot.lane.b32.xlu0 %v180, 80
  %v187 = vpop.permute.xlu0 %186
  %188 = vrot.lane.b32.xlu0 %v181, 80
  %v189 = vpop.permute.xlu0 %188
  %194 = vrot.lane.b32.xlu0 %v182, 32
  %v195 = vpop.permute.xlu0 %194
  %196 = vrot.lane.b32.xlu0 %v183, 32
  %v197 = vpop.permute.xlu0 %196
  %vm200 = vcmask 654336
  %v201 = vsel %vm200, %v178, %v187
  %v202 = vsel %vm200, %v179, %v189
  %v203 = vsel %vm62, %v187, %v195
  %v204 = vsel %vm62, %v189, %v197
  %v205 = vld [vmem:[%s2] sm:$0xff]
  %v206 = vld [vmem:[%s2 + $0x8] sm:$0xff]
  %v207 = vld [vmem:[%s2 + $0x10] sm:$0xff]
  %v208 = vld [vmem:[%s2 + $0x18] sm:$0xff]
  %v209 = vld [vmem:[%s2 + $0x20] sm:$0xff]
  %v210 = vld [vmem:[%s2 + $0x28] sm:$0xff]
  %v211 = vld [vmem:[%s2 + $0x30] sm:$0xff]
  %v212 = vld [vmem:[%s2 + $0x38] sm:$0xff]
  %v213 = vld [vmem:[%s2 + $0x40] sm:$0xff]
  %v214 = vld [vmem:[%s2 + $0x48] sm:$0xff]
  %v215 = vld [vmem:[%s2 + $0x50] sm:$0xff]
  %v216 = vld [vmem:[%s2 + $0x58] sm:$0xff]
  %v217 = vld [vmem:[%s2 + $0x60] sm:$0xff]
  %v218 = vld [vmem:[%s2 + $0x68] sm:$0xff]
  %v219 = vld [vmem:[%s2 + $0x70] sm:$0xff]
  %v220 = vld [vmem:[%s2 + $0x78] sm:$0xff]
  %v221 = vld [vmem:[%s2 + $0x80] sm:$0xff]
  %v222 = vld [vmem:[%s2 + $0x88] sm:$0xff]
  %v223 = vld [vmem:[%s2 + $0x90] sm:$0xff]
  %v224 = vld [vmem:[%s2 + $0x98] sm:$0xff]
  %v225 = vld [vmem:[%s2 + $0xa0] sm:$0xff]
  %v226 = vld [vmem:[%s2 + $0xa8] sm:$0xff]
  %v227 = vld [vmem:[%s2 + $0xb0] sm:$0xff]
  %v228 = vld [vmem:[%s2 + $0xb8] sm:$0xff]
  %v229 = vld [vmem:[%s2 + $0xc0] sm:$0xff]
  %v230 = vld [vmem:[%s2 + $0xc8] sm:$0xff]
  %v231 = vld [vmem:[%s2 + $0xd0] sm:$0xff]
  %v232 = vld [vmem:[%s2 + $0xd8] sm:$0xff]
  %v233 = vld [vmem:[%s2 + $0xe0] sm:$0xff]
  %v234 = vld [vmem:[%s2 + $0xe8] sm:$0xff]
  %v235 = vld [vmem:[%s3 + $0x1] sm:$0x1]
  %v236 = vlaneseq
  %v237 = vshrl.u32 %v236, 7
  %v238 = vsub.s32 0, %v237
  %v239 = vrot.slane %v235, %v238
  %vm240 = vcmask 916480
  %v242 = vsel %vm240, %v203, 0
  %v245 = vsel %vm240, %v204, 0
  %247 = vmatprep.subr.mxu0 0.0
  %248 = vmatpush1.msra.mxu0 %v205
  %249 = vmatprep.subr.mxu0 0.0
  %250 = vmatpush1.msra.mxu0 %v206
  %251 = vmatprep.subr.mxu0 0.0
  %252 = vmatpush1.msra.mxu0 %v207
  %253 = vmatprep.subr.mxu0 0.0
  %254 = vmatpush1.msra.mxu0 %v208
  %255 = vmatprep.subr.mxu0 0.0
  %256 = vmatpush1.msra.mxu0 %v209
  %257 = vmatprep.subr.mxu0 0.0
  %258 = vmatpush1.msra.mxu0 %v210
  %259 = vmatprep.subr.mxu0 0.0
  %260 = vmatpush1.msra.mxu0 %v211
  %261 = vmatprep.subr.mxu0 0.0
  %262 = vmatpush1.msra.mxu0 %v212
  %263 = vmatprep.subr.mxu0 0.0
  %264 = vmatpush1.msra.mxu0 %v213
  %265 = vmatprep.subr.mxu0 0.0
  %266 = vmatpush1.msra.mxu0 %v214
  %267 = vmatprep.subr.mxu0 0.0
  %268 = vmatpush1.msra.mxu0 %v215
  %269 = vmatprep.subr.mxu0 0.0
  %270 = vmatpush1.msra.mxu0 %v216
  %271 = vmatprep.subr.mxu0 0.0
  %272 = vmatpush1.msra.mxu0 %v217
  %273 = vmatprep.subr.mxu0 0.0
  %274 = vmatpush1.msra.mxu0 %v218
  %275 = vmatprep.subr.mxu0 0.0
  %276 = vmatpush1.msra.mxu0 %v219
  %277 = vmatprep.subr.mxu0 0.0
  %278 = vmatpush1.msra.mxu0 %v220
  %279 = vmatprep.subr.mxu0 0.0
  %280 = vmatpush1.msra.mxu0 %v221
  %281 = vmatprep.subr.mxu0 0.0
  %282 = vmatpush1.msra.mxu0 %v222
  %283 = vmatprep.subr.mxu0 0.0
  %284 = vmatpush1.msra.mxu0 %v223
  %285 = vmatprep.subr.mxu0 0.0
  %286 = vmatpush1.msra.mxu0 %v224
  %287 = vmatprep.subr.mxu0 0.0
  %288 = vmatpush1.msra.mxu0 %v225
  %289 = vmatprep.subr.mxu0 0.0
  %290 = vmatpush1.msra.mxu0 %v226
  %291 = vmatprep.subr.mxu0 0.0
  %292 = vmatpush1.msra.mxu0 %v227
  %293 = vmatprep.subr.mxu0 0.0
  %294 = vmatpush1.msra.mxu0 %v228
  %295 = vmatprep.subr.mxu0 0.0
  %296 = vmatpush1.msra.mxu0 %v229
  %297 = vmatprep.subr.mxu0 0.0
  %298 = vmatpush1.msra.mxu0 %v230
  %299 = vmatprep.subr.mxu0 0.0
  %300 = vmatpush1.msra.mxu0 %v231
  %301 = vmatprep.subr.mxu0 0.0
  %302 = vmatpush1.msra.mxu0 %v232
  %303 = vmatprep.subr.mxu0 0.0
  %304 = vmatpush1.msra.mxu0 %v233
  %305 = vmatprep.subr.mxu0 0.0
  %306 = vmatpush1.msra.mxu0 %v234
  %307 = vmatprep.subr.mxu0 0.0
  %308 = vmatpush1.msra.mxu0 0.0
  %309 = vmatprep.subr.mxu0 0.0
  %310 = vmatpush1.msra.mxu0 0.0
  %311 = vmatprep.mubr.f32.mxu0 %v242
  %312 = vmatmul.mubr.f32.gmra.mrb[0].mxu0 %v201
  %v313 = vpop.f32.mrb[0].mxu0
  %v314 = vadd.f32 %v239, %v313
  %v315 = vpop.f32.mrb[0].mxu0
  %316 = vmatprep.mubr.f32.mxu0 %v245
  %317 = vmatmul.mubr.f32.gmra.mrb[0].mxu0 %v202
  %v318 = vpop.f32.mrb[0].mxu0
  %v319 = vadd.f32 %v239, %v318
  %v320 = vpop.f32.mrb[0].mxu0
  %321 = vdwg.mxu0
  %v322 = vmax.f32 %v314, 0.0
  %v323 = vmax.f32 %v319, 0.0
  %vm324 = vcmask 779264
  %325 = vst.msk [vmem:[#allocation3] sm:$0x3] %vm324, 0.0
  %326 = vst.msk [vmem:[#allocation3 + $0x10] sm:$0x3] %vm324, 0.0
  %327 = vst.msk [vmem:[#allocation3 + $0xa] sm:$0x3] %vm324, 0.0
  %328 = vst.msk [vmem:[#allocation3 + $0x1a] sm:$0x3] %vm324, 0.0
  %vm329 = vcmask 130048
  %330 = vst.msk [vmem:[#allocation3] sm:$0xff] %vm329, 0.0
  %vm331 = vcmask 125952
  %332 = vst.msk [vmem:[#allocation3 + $0x8] sm:$0xf] %vm331, 0.0
  %333 = vst.msk [vmem:[#allocation3 + $0x10] sm:$0xff] %vm329, 0.0
  %334 = vst.msk [vmem:[#allocation3 + $0x18] sm:$0xf] %vm331, 0.0
  %vm335 = vcmask 786048
  %336 = vst.msk [vmem:[#allocation3] sm:$0xff] %vm335, 0.0
  %vm337 = vcmask 781952
  %338 = vst.msk [vmem:[#allocation3 + $0x8] sm:$0xf] %vm337, 0.0
  %339 = vst.msk [vmem:[#allocation3 + $0x10] sm:$0xff] %vm335, 0.0
  %340 = vst.msk [vmem:[#allocation3 + $0x18] sm:$0xf] %vm337, 0.0
  %341 = vrot.lane.b32.xlu0 %v147, 80
  %v342 = vpop.permute.xlu0 %341
  %343 = vrot.lane.b32.xlu0 %v149, 80
  %v344 = vpop.permute.xlu0 %343
  %vm347 = vcmask 654464
  %348 = vst.msk [vmem:[#allocation3 + $0x2] sm:$0xff] %vm347, %v342
  %349 = vst.msk [vmem:[#allocation3 + $0x12] sm:$0xff] %vm347, %v344
  %v350 = vld [vmem:[#allocation3] sm:$0xff]
  %v351 = vld [vmem:[#allocation3 + $0x10] sm:$0xff]
  %v352 = vld [vmem:[#allocation3 + $0x1] sm:$0xff]
  %v353 = vld [vmem:[#allocation3 + $0x11] sm:$0xff]
  %v354 = vld [vmem:[#allocation3 + $0x2] sm:$0xff]
  %v355 = vld [vmem:[#allocation3 + $0x12] sm:$0xff]
  %v356 = vld [vmem:[#allocation3 + $0x3] sm:$0xff]
  %v357 = vld [vmem:[#allocation3 + $0x13] sm:$0xff]
  %v358 = vld [vmem:[#allocation3 + $0x4] sm:$0xff]
  %v359 = vld [vmem:[#allocation3 + $0x14] sm:$0xff]
  %362 = vrot.lane.b32.xlu0 %v352, 96
  %v363 = vpop.permute.xlu0 %362
  %364 = vrot.lane.b32.xlu0 %v353, 96
  %v365 = vpop.permute.xlu0 %364
  %370 = vrot.lane.b32.xlu0 %v354, 64
  %v371 = vpop.permute.xlu0 %370
  %372 = vrot.lane.b32.xlu0 %v355, 64
  %v373 = vpop.permute.xlu0 %372
  %378 = vrot.lane.b32.xlu0 %v356, 32
  %v379 = vpop.permute.xlu0 %378
  %380 = vrot.lane.b32.xlu0 %v357, 32
  %v381 = vpop.permute.xlu0 %380
  %vm384 = vcmask 785408
  %v385 = vsel %vm384, %v350, %v363
  %v386 = vsel %vm384, %v351, %v365
  %vm387 = vcmask 523264
  %v388 = vsel %vm387, %v363, %v371
  %v389 = vsel %vm387, %v365, %v373
  %v390 = vsel %vm62, %v371, %v379
  %v391 = vsel %vm62, %v373, %v381
  %v392 = vld [vmem:[%s2 + $0xf0] sm:$0xff]
  %v393 = vld [vmem:[%s2 + $0xf8] sm:$0xff]
  %v394 = vld [vmem:[%s2 + $0x100] sm:$0xff]
  %v395 = vld [vmem:[%s2 + $0x108] sm:$0xff]
  %v396 = vld [vmem:[%s2 + $0x110] sm:$0xff]
  %v397 = vld [vmem:[%s2 + $0x118] sm:$0xff]
  %v398 = vld [vmem:[%s2 + $0x120] sm:$0xff]
  %v399 = vld [vmem:[%s2 + $0x128] sm:$0xff]
  %v400 = vld [vmem:[%s2 + $0x130] sm:$0xff]
  %v401 = vld [vmem:[%s2 + $0x138] sm:$0xff]
  %v402 = vld [vmem:[%s2 + $0x140] sm:$0xff]
  %v403 = vld [vmem:[%s2 + $0x148] sm:$0xff]
  %v404 = vld [vmem:[%s2 + $0x150] sm:$0xff]
  %v405 = vld [vmem:[%s2 + $0x158] sm:$0xff]
  %v406 = vld [vmem:[%s2 + $0x160] sm:$0xff]
  %v407 = vld [vmem:[%s2 + $0x168] sm:$0xff]
  %v408 = vld [vmem:[%s2 + $0x170] sm:$0xff]
  %v409 = vld [vmem:[%s2 + $0x178] sm:$0xff]
  %v410 = vld [vmem:[%s2 + $0x180] sm:$0xff]
  %v411 = vld [vmem:[%s2 + $0x188] sm:$0xff]
  %v412 = vld [vmem:[%s2 + $0x190] sm:$0xff]
  %v413 = vld [vmem:[%s2 + $0x198] sm:$0xff]
  %v414 = vld [vmem:[%s2 + $0x1a0] sm:$0xff]
  %v415 = vld [vmem:[%s2 + $0x1a8] sm:$0xff]
  %v416 = vld [vmem:[%s2 + $0x1b0] sm:$0xff]
  %v417 = vld [vmem:[%s2 + $0x1b8] sm:$0xff]
  %v418 = vld [vmem:[%s2 + $0x1c0] sm:$0xff]
  %v419 = vld [vmem:[%s2 + $0x1c8] sm:$0xff]
  %v420 = vld [vmem:[%s2 + $0x1d0] sm:$0xff]
  %v421 = vld [vmem:[%s2 + $0x1d8] sm:$0xff]
  %v422 = vld [vmem:[%s2 + $0x1e0] sm:$0xff]
  %v423 = vld [vmem:[%s2 + $0x1e8] sm:$0xff]
  %v424 = vld [vmem:[%s2 + $0x1f0] sm:$0xff]
  %v425 = vld [vmem:[%s2 + $0x1f8] sm:$0xff]
  %v426 = vld [vmem:[%s2 + $0x200] sm:$0xff]
  %v427 = vld [vmem:[%s2 + $0x208] sm:$0xff]
  %v428 = vld [vmem:[%s2 + $0x210] sm:$0xff]
  %v429 = vld [vmem:[%s2 + $0x218] sm:$0xff]
  %v430 = vld [vmem:[%s2 + $0x220] sm:$0xff]
  %v431 = vld [vmem:[%s2 + $0x228] sm:$0xff]
  %v432 = vld [vmem:[%s2 + $0x230] sm:$0xff]
  %v433 = vld [vmem:[%s2 + $0x238] sm:$0xff]
  %v434 = vld [vmem:[%s2 + $0x240] sm:$0xff]
  %v435 = vld [vmem:[%s2 + $0x248] sm:$0xff]
  %v436 = vld [vmem:[%s2 + $0x250] sm:$0xff]
  %v437 = vld [vmem:[%s2 + $0x258] sm:$0xff]
  %v438 = vld [vmem:[%s2 + $0x260] sm:$0xff]
  %v439 = vld [vmem:[%s2 + $0x268] sm:$0xff]
  %v440 = vld [vmem:[%s2 + $0x270] sm:$0xff]
  %v441 = vld [vmem:[%s2 + $0x278] sm:$0xff]
  %v442 = vld [vmem:[%s2 + $0x280] sm:$0xff]
  %v443 = vld [vmem:[%s2 + $0x288] sm:$0xff]
  %v444 = vld [vmem:[%s2 + $0x290] sm:$0xff]
  %v445 = vld [vmem:[%s2 + $0x298] sm:$0xff]
  %v446 = vld [vmem:[%s2 + $0x2a0] sm:$0xff]
  %v447 = vld [vmem:[%s2 + $0x2a8] sm:$0xff]
  %v448 = vld [vmem:[%s2 + $0x2b0] sm:$0xff]
  %v449 = vld [vmem:[%s2 + $0x2b8] sm:$0xff]
  %v450 = vld [vmem:[%s2 + $0x2c0] sm:$0xff]
  %v451 = vld [vmem:[%s2 + $0x2c8] sm:$0xff]
  %v452 = vld [vmem:[%s4] sm:$0xff]
  %v453 = vld [vmem:[%s4 + $0x8] sm:$0xff]
  %v455 = vsel %vm384, %v358, 0
  %v458 = vsel %vm384, %v359, 0
  %460 = vmatprep.subr.mxu0 0.0
  %461 = vmatpush1.msra.mxu0 %v392
  %462 = vmatprep.subr.mxu0 0.0
  %463 = vmatpush1.msra.mxu0 %v393
  %464 = vmatprep.subr.mxu0 0.0
  %465 = vmatpush1.msra.mxu0 %v394
  %466 = vmatprep.subr.mxu0 0.0
  %467 = vmatpush1.msra.mxu0 %v395
  %468 = vmatprep.subr.mxu0 0.0
  %469 = vmatpush1.msra.mxu0 %v396
  %470 = vmatprep.subr.mxu0 0.0
  %471 = vmatpush1.msra.mxu0 %v397
  %472 = vmatprep.subr.mxu0 0.0
  %473 = vmatpush1.msra.mxu0 %v398
  %474 = vmatprep.subr.mxu0 0.0
  %475 = vmatpush1.msra.mxu0 %v399
  %476 = vmatprep.subr.mxu0 0.0
  %477 = vmatpush1.msra.mxu0 %v400
  %478 = vmatprep.subr.mxu0 0.0
  %479 = vmatpush1.msra.mxu0 %v401
  %480 = vmatprep.subr.mxu0 0.0
  %481 = vmatpush1.msra.mxu0 %v402
  %482 = vmatprep.subr.mxu0 0.0
  %483 = vmatpush1.msra.mxu0 %v403
  %484 = vmatprep.subr.mxu0 0.0
  %485 = vmatpush1.msra.mxu0 %v404
  %486 = vmatprep.subr.mxu0 0.0
  %487 = vmatpush1.msra.mxu0 %v405
  %488 = vmatprep.subr.mxu0 0.0
  %489 = vmatpush1.msra.mxu0 %v406
  %490 = vmatprep.subr.mxu0 0.0
  %491 = vmatpush1.msra.mxu0 %v407
  %492 = vmatprep.subr.mxu0 0.0
  %493 = vmatpush1.msra.mxu0 %v408
  %494 = vmatprep.subr.mxu0 0.0
  %495 = vmatpush1.msra.mxu0 %v409
  %496 = vmatprep.subr.mxu0 0.0
  %497 = vmatpush1.msra.mxu0 %v410
  %498 = vmatprep.subr.mxu0 0.0
  %499 = vmatpush1.msra.mxu0 %v411
  %500 = vmatprep.subr.mxu0 0.0
  %501 = vmatpush1.msra.mxu0 %v412
  %502 = vmatprep.subr.mxu0 0.0
  %503 = vmatpush1.msra.mxu0 %v413
  %504 = vmatprep.subr.mxu0 0.0
  %505 = vmatpush1.msra.mxu0 %v414
  %506 = vmatprep.subr.mxu0 0.0
  %507 = vmatpush1.msra.mxu0 %v415
  %508 = vmatprep.subr.mxu0 0.0
  %509 = vmatpush1.msra.mxu0 %v416
  %510 = vmatprep.subr.mxu0 0.0
  %511 = vmatpush1.msra.mxu0 %v417
  %512 = vmatprep.subr.mxu0 0.0
  %513 = vmatpush1.msra.mxu0 %v418
  %514 = vmatprep.subr.mxu0 0.0
  %515 = vmatpush1.msra.mxu0 %v419
  %516 = vmatprep.subr.mxu0 0.0
  %517 = vmatpush1.msra.mxu0 %v420
  %518 = vmatprep.subr.mxu0 0.0
  %519 = vmatpush1.msra.mxu0 %v421
  %520 = vmatprep.subr.mxu0 0.0
  %521 = vmatpush1.msra.mxu0 %v422
  %522 = vmatprep.subr.mxu0 0.0
  %523 = vmatpush1.msra.mxu0 %v423
  %524 = vmatprep.mubr.f32.mxu0 %v388
  %525 = vmatmul.mubr.f32.gmra.mrb[0].mxu0 %v385
  %v526 = vpop.f32.mrb[0].mxu0
  %v527 = vadd.f32 %v452, %v526
  %v528 = vpop.f32.mrb[0].mxu0
  %529 = vmatprep.mubr.f32.mxu0 %v389
  %530 = vmatmul.mubr.f32.gmra.mrb[0].mxu0 %v386
  %v531 = vpop.f32.mrb[0].mxu0
  %v532 = vadd.f32 %v453, %v531
  %v533 = vpop.f32.mrb[0].mxu0
  %534 = vdwg.mxu0
  %535 = vmatprep.subr.mxu0 0.0
  %536 = vmatpush1.msra.mxu0 %v424
  %537 = vmatprep.subr.mxu0 0.0
  %538 = vmatpush1.msra.mxu0 %v425
  %539 = vmatprep.subr.mxu0 0.0
  %540 = vmatpush1.msra.mxu0 %v426
  %541 = vmatprep.subr.mxu0 0.0
  %542 = vmatpush1.msra.mxu0 %v427
  %543 = vmatprep.subr.mxu0 0.0
  %544 = vmatpush1.msra.mxu0 %v428
  %545 = vmatprep.subr.mxu0 0.0
  %546 = vmatpush1.msra.mxu0 %v429
  %547 = vmatprep.subr.mxu0 0.0
  %548 = vmatpush1.msra.mxu0 %v430
  %549 = vmatprep.subr.mxu0 0.0
  %550 = vmatpush1.msra.mxu0 %v431
  %551 = vmatprep.subr.mxu0 0.0
  %552 = vmatpush1.msra.mxu0 %v432
  %553 = vmatprep.subr.mxu0 0.0
  %554 = vmatpush1.msra.mxu0 %v433
  %555 = vmatprep.subr.mxu0 0.0
  %556 = vmatpush1.msra.mxu0 %v434
  %557 = vmatprep.subr.mxu0 0.0
  %558 = vmatpush1.msra.mxu0 %v435
  %559 = vmatprep.subr.mxu0 0.0
  %560 = vmatpush1.msra.mxu0 %v436
  %561 = vmatprep.subr.mxu0 0.0
  %562 = vmatpush1.msra.mxu0 %v437
  %563 = vmatprep.subr.mxu0 0.0
  %564 = vmatpush1.msra.mxu0 %v438
  %565 = vmatprep.subr.mxu0 0.0
  %566 = vmatpush1.msra.mxu0 %v439
  %567 = vmatprep.subr.mxu0 0.0
  %568 = vmatpush1.msra.mxu0 %v440
  %569 = vmatprep.subr.mxu0 0.0
  %570 = vmatpush1.msra.mxu0 %v441
  %571 = vmatprep.subr.mxu0 0.0
  %572 = vmatpush1.msra.mxu0 %v442
  %573 = vmatprep.subr.mxu0 0.0
  %574 = vmatpush1.msra.mxu0 %v443
  %575 = vmatprep.subr.mxu0 0.0
  %576 = vmatpush1.msra.mxu0 %v444
  %577 = vmatprep.subr.mxu0 0.0
  %578 = vmatpush1.msra.mxu0 %v445
  %579 = vmatprep.subr.mxu0 0.0
  %580 = vmatpush1.msra.mxu0 %v446
  %581 = vmatprep.subr.mxu0 0.0
  %582 = vmatpush1.msra.mxu0 %v447
  %583 = vmatprep.subr.mxu0 0.0
  %584 = vmatpush1.msra.mxu0 %v448
  %585 = vmatprep.subr.mxu0 0.0
  %586 = vmatpush1.msra.mxu0 %v449
  %587 = vmatprep.subr.mxu0 0.0
  %588 = vmatpush1.msra.mxu0 %v450
  %589 = vmatprep.subr.mxu0 0.0
  %590 = vmatpush1.msra.mxu0 %v451
  %591 = vmatprep.subr.mxu0 0.0
  %592 = vmatpush1.msra.mxu0 0.0
  %593 = vmatprep.subr.mxu0 0.0
  %594 = vmatpush1.msra.mxu0 0.0
  %595 = vmatprep.subr.mxu0 0.0
  %596 = vmatpush1.msra.mxu0 0.0
  %597 = vmatprep.subr.mxu0 0.0
  %598 = vmatpush1.msra.mxu0 0.0
  %599 = vmatprep.mubr.f32.mxu0 %v455
  %600 = vmatmul.mubr.f32.gmra.mrb[0].mxu0 %v390
  %v601 = vpop.f32.mrb[0].mxu0
  %v602 = vadd.f32 %v527, %v601
  %v603 = vpop.f32.mrb[0].mxu0
  %604 = vmatprep.mubr.f32.mxu0 %v458
  %605 = vmatmul.mubr.f32.gmra.mrb[0].mxu0 %v391
  %v606 = vpop.f32.mrb[0].mxu0
  %v607 = vadd.f32 %v532, %v606
  %v608 = vpop.f32.mrb[0].mxu0
  %609 = vdwg.mxu0
  %v610 = vmax.f32 %v602, 0.0
  %v611 = vmax.f32 %v607, 0.0
  %vm612 = vcmask 319488
  %613 = vst.msk [vmem:[#allocation4] sm:$0x1] %vm612, -3.4028235e+38
  %614 = vst.msk [vmem:[#allocation4 + $0x10] sm:$0x1] %vm612, -3.4028235e+38
  %615 = vst.msk [vmem:[#allocation4 + $0x9] sm:$0x1] %vm612, -3.4028235e+38
  %616 = vst.msk [vmem:[#allocation4 + $0x19] sm:$0x1] %vm612, -3.4028235e+38
  %vm617 = vcmask 31744
  %618 = vst.msk [vmem:[#allocation4] sm:$0xff] %vm617, -3.4028235e+38
  %vm619 = vcmask 25600
  %620 = vst.msk [vmem:[#allocation4 + $0x8] sm:$0x3] %vm619, -3.4028235e+38
  %621 = vst.msk [vmem:[#allocation4 + $0x10] sm:$0xff] %vm617, -3.4028235e+38
  %622 = vst.msk [vmem:[#allocation4 + $0x18] sm:$0x3] %vm619, -3.4028235e+38
  %vm623 = vcmask 326944
  %624 = vst.msk [vmem:[#allocation4] sm:$0xff] %vm623, -3.4028235e+38
  %vm625 = vcmask 320800
  %626 = vst.msk [vmem:[#allocation4 + $0x8] sm:$0x3] %vm625, -3.4028235e+38
  %627 = vst.msk [vmem:[#allocation4 + $0x10] sm:$0xff] %vm623, -3.4028235e+38
  %628 = vst.msk [vmem:[#allocation4 + $0x18] sm:$0x3] %vm625, -3.4028235e+38
  %629 = vrot.lane.b32.xlu0 %v40, 4
  %v630 = vpop.permute.xlu0 %629
  %631 = vrot.lane.b32.xlu0 %v41, 4
  %v632 = vpop.permute.xlu0 %631
  %vm635 = vcmask 293920
  %636 = vst.msk [vmem:[#allocation4 + $0x1] sm:$0xff] %vm635, %v630
  %637 = vst.msk [vmem:[#allocation4 + $0x11] sm:$0xff] %vm635, %v632
  %v638 = vld [vmem:[#allocation4] sm:$0xff]
  %v639 = vld [vmem:[#allocation4 + $0x10] sm:$0xff]
  %v640 = vld [vmem:[#allocation4 + $0x1] sm:$0xff]
  %v641 = vld [vmem:[#allocation4 + $0x11] sm:$0xff]
  %v642 = vld [vmem:[#allocation4 + $0x2] sm:$0xff]
  %v643 = vld [vmem:[#allocation4 + $0x12] sm:$0xff]
  %646 = vrot.lane.b32.xlu0 %v638, 124
  %v647 = vpop.permute.xlu0 %646
  %648 = vrot.lane.b32.xlu0 %v639, 124
  %v649 = vpop.permute.xlu0 %648
  %v652 = vmax.f32 %v638, %v647
  %v653 = vmax.f32 %v639, %v649
  %656 = vrot.lane.b32.xlu0 %v640, 8
  %v657 = vpop.permute.xlu0 %656
  %658 = vrot.lane.b32.xlu0 %v641, 8
  %v659 = vpop.permute.xlu0 %658
  %v662 = vmax.f32 %v638, %v657
  %v663 = vmax.f32 %v639, %v659
  %664 = vrot.lane.b32.xlu0 %v640, 124
  %v665 = vpop.permute.xlu0 %664
  %666 = vrot.lane.b32.xlu0 %v641, 124
  %v667 = vpop.permute.xlu0 %666
  %v670 = vmax.f32 %v640, %v665
  %v671 = vmax.f32 %v641, %v667
  %674 = vrot.lane.b32.xlu0 %v642, 124
  %v675 = vpop.permute.xlu0 %674
  %676 = vrot.lane.b32.xlu0 %v643, 124
  %v677 = vpop.permute.xlu0 %676
  %v680 = vmax.f32 %v642, %v675
  %v681 = vmax.f32 %v643, %v677
  %684 = vrot.lane.b32.xlu0 %v662, 120
  %v685 = vpop.permute.xlu0 %684
  %686 = vrot.lane.b32.xlu0 %v663, 120
  %v687 = vpop.permute.xlu0 %686
  %v690 = vmax.f32 %v652, %v685
  %v691 = vmax.f32 %v653, %v687
  %694 = vrot.lane.b32.xlu0 %v680, 4
  %v695 = vpop.permute.xlu0 %694
  %696 = vrot.lane.b32.xlu0 %v681, 4
  %v697 = vpop.permute.xlu0 %696
  %v700 = vmax.f32 %v670, %v695
  %v701 = vmax.f32 %v671, %v697
  %704 = vrot.lane.b32.xlu0 %v700, 124
  %v705 = vpop.permute.xlu0 %704
  %706 = vrot.lane.b32.xlu0 %v701, 124
  %v707 = vpop.permute.xlu0 %706
  %v710 = vmax.f32 %v690, %v705
  %v711 = vmax.f32 %v691, %v707
  %712 = vrot.lane.b32.xlu0 %v642, 120
  %v713 = vpop.permute.xlu0 %712
  %714 = vrot.lane.b32.xlu0 %v643, 120
  %v715 = vpop.permute.xlu0 %714
  %v718 = vmax.f32 %v710, %v713
  %v719 = vmax.f32 %v711, %v715
  %v720 = vld [vmem:[%s1 + $0x10] sm:$0xff]
  %v721 = vld [vmem:[%s1 + $0x28] sm:$0xff]
  %v722 = vld [vmem:[%s1 + $0x40] sm:$0xff]
  %v723 = vld [vmem:[%s1 + $0x58] sm:$0xff]
  %v724 = vld [vmem:[%s3 + $0x3] sm:$0x1]
  %v725 = vlaneseq
  %v726 = vshrl.u32 %v725, 7
  %v727 = vsub.s32 0, %v726
  %v728 = vrot.slane %v724, %v727
  %v730 = vsel %vm62, %v718, 0
  %v733 = vsel %vm62, %v719, 0
  %735 = vmatprep.subr.mxu0 0.0
  %736 = vmatpush1.msra.mxu0 %v720
  %737 = vmatprep.subr.mxu0 0.0
  %738 = vmatpush1.msra.mxu0 %v721
  %739 = vmatprep.subr.mxu0 0.0
  %740 = vmatpush1.msra.mxu0 %v722
  %741 = vmatprep.subr.mxu0 0.0
  %742 = vmatpush1.msra.mxu0 %v723
  %743 = vmatprep.subr.mxu0 0.0
  %744 = vmatpush1.msra.mxu0 0.0
  %745 = vmatprep.subr.mxu0 0.0
  %746 = vmatpush1.msra.mxu0 0.0
  %747 = vmatprep.subr.mxu0 0.0
  %748 = vmatpush1.msra.mxu0 0.0
  %749 = vmatprep.subr.mxu0 0.0
  %750 = vmatpush1.msra.mxu0 0.0
  %751 = vmatprep.subr.mxu0 0.0
  %752 = vmatpush1.msra.mxu0 0.0
  %753 = vmatprep.subr.mxu0 0.0
  %754 = vmatpush1.msra.mxu0 0.0
  %755 = vmatprep.subr.mxu0 0.0
  %756 = vmatpush1.msra.mxu0 0.0
  %757 = vmatprep.subr.mxu0 0.0
  %758 = vmatpush1.msra.mxu0 0.0
  %759 = vmatprep.subr.mxu0 0.0
  %760 = vmatpush1.msra.mxu0 0.0
  %761 = vmatprep.subr.mxu0 0.0
  %762 = vmatpush1.msra.mxu0 0.0
  %763 = vmatprep.subr.mxu0 0.0
  %764 = vmatpush1.msra.mxu0 0.0
  %765 = vmatprep.subr.mxu0 0.0
  %766 = vmatpush1.msra.mxu0 0.0
  %767 = vmatprep.subr.mxu0 0.0
  %768 = vmatpush1.msra.mxu0 0.0
  %769 = vmatprep.subr.mxu0 0.0
  %770 = vmatpush1.msra.mxu0 0.0
  %771 = vmatprep.subr.mxu0 0.0
  %772 = vmatpush1.msra.mxu0 0.0
  %773 = vmatprep.subr.mxu0 0.0
  %774 = vmatpush1.msra.mxu0 0.0
  %775 = vmatprep.subr.mxu0 0.0
  %776 = vmatpush1.msra.mxu0 0.0
  %777 = vmatprep.subr.mxu0 0.0
  %778 = vmatpush1.msra.mxu0 0.0
  %779 = vmatprep.subr.mxu0 0.0
  %780 = vmatpush1.msra.mxu0 0.0
  %781 = vmatprep.subr.mxu0 0.0
  %782 = vmatpush1.msra.mxu0 0.0
  %783 = vmatprep.subr.mxu0 0.0
  %784 = vmatpush1.msra.mxu0 0.0
  %785 = vmatprep.subr.mxu0 0.0
  %786 = vmatpush1.msra.mxu0 0.0
  %787 = vmatprep.subr.mxu0 0.0
  %788 = vmatpush1.msra.mxu0 0.0
  %789 = vmatprep.subr.mxu0 0.0
  %790 = vmatpush1.msra.mxu0 0.0
  %791 = vmatprep.subr.mxu0 0.0
  %792 = vmatpush1.msra.mxu0 0.0
  %793 = vmatprep.subr.mxu0 0.0
  %794 = vmatpush1.msra.mxu0 0.0
  %795 = vmatprep.subr.mxu0 0.0
  %796 = vmatpush1.msra.mxu0 0.0
  %797 = vmatprep.subr.mxu0 0.0
  %798 = vmatpush1.msra.mxu0 0.0
  %799 = vmatprep.mubr.f32.mxu0 0.0
  %800 = vmatmul.mubr.f32.gmra.mrb[0].mxu0 %v730
  %v801 = vpop.f32.mrb[0].mxu0
  %v802 = vadd.f32 %v728, %v801
  %v803 = vpop.f32.mrb[0].mxu0
  %804 = vmatprep.mubr.f32.mxu0 0.0
  %805 = vmatmul.mubr.f32.gmra.mrb[0].mxu0 %v733
  %v806 = vpop.f32.mrb[0].mxu0
  %v807 = vadd.f32 %v728, %v806
  %v808 = vpop.f32.mrb[0].mxu0
  %809 = vdwg.mxu0
  %v810 = vmax.f32 %v802, 0.0
  %v811 = vmax.f32 %v807, 0.0
  %v812 = vadd.f32 %v146, %v322
  %v813 = vadd.f32 %v148, %v323
  %v814 = vadd.f32 %v812, %v610
  %v815 = vadd.f32 %v813, %v611
  %v816 = vadd.f32 %v814, %v810
  %v817 = vadd.f32 %v815, %v811
  %818 = vst [vmem:[%s5] sm:$0xff] %v816
  %819 = vst [vmem:[%s5 + $0x8] sm:$0xff] %v817
  // Predicated region
  $region22: #{downsample_forward.1} parent=0 // pred_check
    _
  $region23: #{downsample_forward.1} parent=0 // pred_check_branch
    %821 = sbr.rel (0) target = $region25
  $region24: #{downsample_forward.1} parent=0 // pred_region
    _
  $region25: #{downsample_forward.1} parent=0 // pred_fallthru
    _
  // Predicated region
  $region26: #{downsample_forward.1} parent=0 // pred_check
    _
  $region27: #{downsample_forward.1} parent=0 // pred_check_branch
    %823 = sbr.rel (0) target = $region29
  $region28: #{downsample_forward.1} parent=0 // pred_region
    _
  $region29: #{downsample_forward.1} parent=0 // pred_fallthru
    _

</llo_original>
